<compile_context>
chip_gen: v7x
topology: tpu7x:2x2x1
jax: 0.10.0
libtpu: 0.0.40
codegen_flags: <defaults>
</compile_context>

<pallas_src>
import functools

import jax
import jax.numpy as jnp
from jax.experimental import pallas as pl
from jax.experimental.pallas import tpu as pltpu


def _round_up(x, m):
    return (x + m - 1) // m * m


def _pad2d(x, rows, cols):
    r, c = x.shape
    if r == rows and c == cols:
        return x
    return jnp.pad(x, ((0, rows - r), (0, cols - c)))


def _decoder_kernel(adj_ref, feat_ref, w_ref, out_ref, acc_ref):
    # Zero the accumulator on the first reduction step.
    @pl.when(pl.program_id(1) == 0)
    def _():
        acc_ref[...] = jnp.zeros_like(acc_ref)

    # Fused stage 1: x_k = feat[k_tile] @ W2                      (tk, Op)
    x_k = jnp.dot(feat_ref[...], w_ref[...],
                  preferred_element_type=jnp.float32)
    # Fused stage 2: acc += adj[i_tile, k_tile] @ x_k             (tm, Op)
    acc_ref[...] += jnp.dot(adj_ref[...], x_k,
                            preferred_element_type=jnp.float32)

    # Lane-dense writeback on the last reduction step.
    @pl.when(pl.program_id(1) == pl.num_programs(1) - 1)
    def _():
        out_ref[...] = acc_ref[...].astype(out_ref.dtype)


@functools.partial(jax.jit, static_argnames=("tile_m", "tile_k"))
def decoder_forward(feat, adj, weight2, *, tile_m=256, tile_k=256):
    N, F = feat.shape
    assert adj.shape == (N, N)
    O = weight2.shape[1]

    # Tile constraints: tm on sublanes (x8), tk on lanes (x128), and the
    # padded N must be divisible by both.
    assert tile_m % 8 == 0 and tile_k % 128 == 0
    assert max(tile_m, tile_k) % min(tile_m, tile_k) == 0

    Np = _round_up(N, max(tile_m, tile_k))
    Fp = _round_up(F, 128)   # lane dim of feat / sublane dim of W2
    Op = _round_up(O, 128)   # lane dim of W2 / accumulator / output

    adj_p = _pad2d(adj.astype(jnp.float32), Np, Np)
    feat_p = _pad2d(feat.astype(jnp.float32), Np, Fp)
    w_p = _pad2d(weight2.astype(jnp.float32), Fp, Op)

    grid = (Np // tile_m, Np // tile_k)

    emb_p = pl.pallas_call(
        _decoder_kernel,
        out_shape=jax.ShapeDtypeStruct((Np, Op), feat.dtype),
        grid_spec=pltpu.PrefetchScalarGridSpec(
            num_scalar_prefetch=0,
            grid=grid,
            in_specs=[
                pl.BlockSpec((tile_m, tile_k), lambda i, k: (i, k)),  # adj tile
                pl.BlockSpec((tile_k, Fp), lambda i, k: (k, 0)),      # feat tile
                pl.BlockSpec((Fp, Op), lambda i, k: (0, 0)),          # W2 (resident)
            ],
            out_specs=pl.BlockSpec((tile_m, Op), lambda i, k: (i, 0)),
            scratch_shapes=[pltpu.VMEM((tile_m, Op), jnp.float32)],
        ),
        compiler_params=pltpu.CompilerParams(
            dimension_semantics=("parallel", "arbitrary"),
            vmem_limit_bytes=32 * 1024 * 1024,
        ),
    )(adj_p, feat_p, w_p)

    return emb_p[:N, :O]


def _xavier_uniform(key, shape, dtype=jnp.float32):
    fan_in, fan_out = shape
    bound = (6.0 / (fan_in + fan_out)) ** 0.5
    return jax.random.uniform(key, shape, dtype, minval=-bound, maxval=bound)


def _reference(feat, adj, w2):
    x = jnp.dot(feat, w2, precision=jax.lax.Precision.HIGHEST)
    return jnp.dot(adj, x, precision=jax.lax.Precision.HIGHEST)


if __name__ == "__main__":
    N, in_feat, out_feat = 512, 64, 48

    key = jax.random.PRNGKey(0)
    kf, kw, ka = jax.random.split(key, 3)

    feat = jax.random.normal(kf, (N, in_feat), jnp.float32)
    weight2 = _xavier_uniform(kw, (in_feat, out_feat))

    # Dense stand-in for the (normalized) sparse graph adjacency used by spmm.
    mask = (jax.random.uniform(ka, (N, N)) < 0.05).astype(jnp.float32)
    a = mask + jnp.eye(N, dtype=jnp.float32)
    adj = a / jnp.sum(a, axis=1, keepdims=True)

    emb = decoder_forward(feat, adj, weight2, tile_m=256, tile_k=256)
    emb = jax.block_until_ready(emb)

    ref = _reference(feat, adj, weight2)
    assert emb.shape == (N, out_feat)
    max_err = float(jnp.max(jnp.abs(emb - ref)))
    assert jnp.allclose(emb, ref, atol=1e-4, rtol=1e-4), max_err

    print("KERNEL_OK")
</pallas_src>

<mosaic_0001>
module attributes {stable_mosaic.version = 11 : i64} {
  func.func @_decoder_kernel(%arg0: i32, %arg1: i32, %arg2: memref<256x256xf32, #tpu.memory_space<vmem>>, %arg3: memref<256x128xf32, #tpu.memory_space<vmem>>, %arg4: memref<128x128xf32, #tpu.memory_space<vmem>>, %arg5: memref<256x128xf32, #tpu.memory_space<vmem>>, %arg6: memref<256x128xf32, #tpu.memory_space<vmem>>) attributes {dimension_semantics = [#tpu.dimension_semantics<parallel>, #tpu.dimension_semantics<arbitrary>], iteration_bounds = array<i64: 2, 2>, scalar_prefetch = 0 : i64, scratch_operands = 1 : i64, tpu.core_type = #tpu.core_type<tc>, window_params = [{transform_indices = @transform_0, window_bounds = array<i64: 256, 256>}, {transform_indices = @transform_1, window_bounds = array<i64: 256, 128>}, {pipeline_mode = #tpu.pipeline_mode<synchronous>, transform_indices = @transform_2, window_bounds = array<i64: 128, 128>}, {transform_indices = @transform_3, window_bounds = array<i64: 256, 128>}]} {
    %c0_i32 = arith.constant 0 : i32
    %0 = arith.cmpi eq, %arg1, %c0_i32 : i32
    %1 = arith.extui %0 : i1 to i32
    %c0_i32_0 = arith.constant 0 : i32
    %2 = arith.cmpi ne, %1, %c0_i32_0 : i32
    scf.if %2 {
      %cst_12 = arith.constant 0.000000e+00 : f32
      %14 = vector.broadcast %cst_12 : f32 to vector<256x128xf32>
      %c0_13 = arith.constant 0 : index
      %c0_14 = arith.constant 0 : index
      %15 = vector.load %arg6[%c0_13, %c0_14] : memref<256x128xf32, #tpu.memory_space<vmem>>, vector<256x128xf32>
      tpu.vector_store %arg6[%c0_13, %c0_14], %14 {strides = array<i32>} : memref<256x128xf32, #tpu.memory_space<vmem>>, vector<256x128xf32>,
    } else {
    }
    %c0 = arith.constant 0 : index
    %c0_1 = arith.constant 0 : index
    %3 = vector.load %arg3[%c0, %c0_1] : memref<256x128xf32, #tpu.memory_space<vmem>>, vector<256x128xf32>
    %c0_2 = arith.constant 0 : index
    %c0_3 = arith.constant 0 : index
    %4 = vector.load %arg4[%c0_2, %c0_3] : memref<128x128xf32, #tpu.memory_space<vmem>>, vector<128x128xf32>
    %cst = arith.constant dense<0.000000e+00> : vector<256x128xf32>
    %5 = tpu.matmul %3, %4, %cst {dimension_numbers = #tpu.dot_dimension_numbers<[1], [0], [0], [1], [0, 0, 1, 1], [], []>} : vector<256x128xf32>, vector<128x128xf32>, vector<256x128xf32> -> vector<256x128xf32>
    %c0_4 = arith.constant 0 : index
    %c0_5 = arith.constant 0 : index
    %6 = vector.load %arg6[%c0_4, %c0_5] : memref<256x128xf32, #tpu.memory_space<vmem>>, vector<256x128xf32>
    %c0_6 = arith.constant 0 : index
    %c0_7 = arith.constant 0 : index
    %7 = vector.load %arg2[%c0_6, %c0_7] : memref<256x256xf32, #tpu.memory_space<vmem>>, vector<256x256xf32>
    %cst_8 = arith.constant dense<0.000000e+00> : vector<256x128xf32>
    %8 = tpu.matmul %7, %5, %cst_8 {dimension_numbers = #tpu.dot_dimension_numbers<[1], [0], [0], [1], [0, 0, 1, 1], [], []>} : vector<256x256xf32>, vector<256x128xf32>, vector<256x128xf32> -> vector<256x128xf32>
    %9 = arith.addf %6, %8 : vector<256x128xf32>
    %c0_9 = arith.constant 0 : index
    %c0_10 = arith.constant 0 : index
    %10 = vector.load %arg6[%c0_9, %c0_10] : memref<256x128xf32, #tpu.memory_space<vmem>>, vector<256x128xf32>
    tpu.vector_store %arg6[%c0_9, %c0_10], %9 {strides = array<i32>} : memref<256x128xf32, #tpu.memory_space<vmem>>, vector<256x128xf32>,
    %c1_i32 = arith.constant 1 : i32
    %11 = arith.cmpi eq, %arg1, %c1_i32 : i32
    %12 = arith.extui %11 : i1 to i32
    %c0_i32_11 = arith.constant 0 : i32
    %13 = arith.cmpi ne, %12, %c0_i32_11 : i32
    scf.if %13 {
      %c0_12 = arith.constant 0 : index
      %c0_13 = arith.constant 0 : index
      %14 = vector.load %arg6[%c0_12, %c0_13] : memref<256x128xf32, #tpu.memory_space<vmem>>, vector<256x128xf32>
      %c0_14 = arith.constant 0 : index
      %c0_15 = arith.constant 0 : index
      %15 = vector.load %arg5[%c0_14, %c0_15] : memref<256x128xf32, #tpu.memory_space<vmem>>, vector<256x128xf32>
      tpu.vector_store %arg5[%c0_14, %c0_15], %14 {strides = array<i32>} : memref<256x128xf32, #tpu.memory_space<vmem>>, vector<256x128xf32>,
    } else {
    }
    return
  }
  func.func @transform_0(%arg0: i32, %arg1: i32) -> (i32, i32) {
    %c0_i32 = arith.constant 0 : i32
    return %arg0, %arg1 : i32, i32
  }
  func.func @transform_1(%arg0: i32, %arg1: i32) -> (i32, i32) {
    %c0_i32 = arith.constant 0 : i32
    %c0_i32_0 = arith.constant 0 : i32
    return %arg1, %c0_i32 : i32, i32
  }
  func.func @transform_2(%arg0: i32, %arg1: i32) -> (i32, i32) {
    %c0_i32 = arith.constant 0 : i32
    %c0_i32_0 = arith.constant 0 : i32
    %c0_i32_1 = arith.constant 0 : i32
    return %c0_i32, %c0_i32_0 : i32, i32
  }
  func.func @transform_3(%arg0: i32, %arg1: i32) -> (i32, i32) {
    %c0_i32 = arith.constant 0 : i32
    %c0_i32_0 = arith.constant 0 : i32
    return %arg0, %c0_i32 : i32, i32
  }
}

</mosaic_0001>

<llo_original>
// kernel: decoder_forward.1
$region0: #{decoder_forward.1}
  #allocation0 [shape = 'u32[]', space=smem, size = 0x4, offset = 0x4, fixed_abs, tag = 'smem constant byte address 0x4 - core index']
  #allocation1 [shape = 'u32[144,128]{1,0:T(1,128)}', space=vmem, size = 0x12000, scoped, tag = 'internal scratch']
  #allocation2 [shape = 'f32[256,128]{1,0:T(8,128)}', space=vmem, size = 0x20000, scoped, tag = 'scratch operand']
  %s0 = inlined_call_operand.vmem [shape: f32[512,512], index: 0, kind: input, shape index: {}]
  %s1 = inlined_call_operand.vmem [shape: f32[512,128], index: 1, kind: input, shape index: {}]
  %s2 = inlined_call_operand.vmem [shape: f32[128,128], index: 2, kind: input, shape index: {}]
  %s3 = inlined_call_operand.vmem [shape: f32[512,128], index: 3, kind: output, shape index: {}]
  %s4 = sld [smem:[#allocation0]]
  $region76: #{decoder_forward.1} parent=0
    _
  %s6 = ssub.s32 1, %s4
  %s7 = scalar_select 0, %s6, %s4
  $region1: #{decoder_forward.1} parent=0
    #allocation3 [shape = 'u8[524288]{0}', space=vmem, size = 0x80000, scoped, tag = 'input window, operand 0']
    loop: start=0, step=1, limit=6
    $region2: #{decoder_forward.1} parent=1 // loop_pre_header
      _
    $region3: #{decoder_forward.1} parent=1 // loop_header
      %s9 = sphi 0, %s13
      %p10 = scmp.ge.s32.totalorder %s9, 6
      %s16 = sphi 0, %s28
      %s17 = sphi 0, %s24
      %s18 = sphi 0, %s16
      %s19 = sphi 0, %s17
      %s20 = sphi 0, %s18
      %s21 = sphi 0, %s19
      %s33 = sphi 0, %s35
      %s36 = sphi 0, %s33
      %s37 = sphi 0, %s36
      %s53 = sphi 0, %s37
      %s59 = sphi 0, %s61
      %s62 = sphi 0, %s59
      %s63 = sphi 0, %s62
      %s79 = sphi 0, %s63
      %s83 = sphi 0, %s83
      %s85 = sphi 0, %s83
      %s86 = sphi 0, %s85
      %s100 = sphi 0, %s86
      %s106 = sphi 0, %s108
      %s109 = sphi 0, %s106
      %s110 = sphi 0, %s109
      %s126 = sphi 0, %s110
    $region4: #{decoder_forward.1} parent=1 // loop_header_branch
      %12 = sbr.rel (%p10) target = $region8
    $region5: #{decoder_forward.1} parent=1 // loop_body
      %s14 = ssub.s32 %s9, 1
      %s15 = ssub.s32 %s9, 2
      %s22 = sadd.s32 1, %s17
      %p23 = scmp.ge.s32.totalorder %s22, 2
      %s24 = scalar_select %p23, 0, %s22
      %s25 = sadd.s32 1, %s16
      %s26 = scalar_select %p23, %s25, %s16
      %p27 = scmp.ge.s32.totalorder %s26, 2
      %s28 = scalar_select %p27, 0, %s26
      %s29 = ssub.s32 %s16, %s28
      %s30 = ssub.s32 %s17, %s24
      %s31 = sor.u32 %s29, %s30
      %p32 = scmp.eq.s32.totalorder %s31, 0
      %s34 = sadd.s32 %s33, 1
      %s35 = scalar_select %p32, %s33, %s34
      %p38 = pneg %p32
      %p39 = scmp.eq.s32.totalorder %s9, 3
      %p40 = por %p38, %p39
      %p41 = scmp.ne.s32.totalorder %s33, %s36
      %p42 = scmp.eq.s32.totalorder %s9, 0
      %p43 = por %p41, %p42
      %p44 = scmp.ne.s32.totalorder %s33, %s36
      %p45 = scmp.eq.s32.totalorder %s14, 3
      %p46 = por %p44, %p45
      %p47 = scmp.ne.s32.totalorder %s36, %s37
      %p48 = scmp.eq.s32.totalorder %s14, 0
      %p49 = por %p47, %p48
      %p50 = scmp.ne.s32.totalorder %s36, %s37
      %p51 = scmp.eq.s32.totalorder %s15, 3
      %p52 = por %p50, %p51
      %p54 = scmp.ne.s32.totalorder %s37, %s53
      %p55 = scmp.eq.s32.totalorder %s15, 0
      %p56 = por %p54, %p55
      %s57 = ssub.s32 %s17, %s24
      %p58 = scmp.eq.s32.totalorder %s57, 0
      %s60 = sadd.s32 %s59, 1
      %s61 = scalar_select %p58, %s59, %s60
      %p64 = pneg %p58
      %p65 = scmp.eq.s32.totalorder %s9, 3
      %p66 = por %p64, %p65
      %p67 = scmp.ne.s32.totalorder %s59, %s62
      %p68 = scmp.eq.s32.totalorder %s9, 0
      %p69 = por %p67, %p68
      %p70 = scmp.ne.s32.totalorder %s59, %s62
      %p71 = scmp.eq.s32.totalorder %s14, 3
      %p72 = por %p70, %p71
      %p73 = scmp.ne.s32.totalorder %s62, %s63
      %p74 = scmp.eq.s32.totalorder %s14, 0
      %p75 = por %p73, %p74
      %p76 = scmp.ne.s32.totalorder %s62, %s63
      %p77 = scmp.eq.s32.totalorder %s15, 3
      %p78 = por %p76, %p77
      %p80 = scmp.ne.s32.totalorder %s63, %s79
      %p81 = scmp.eq.s32.totalorder %s15, 0
      %p82 = por %p80, %p81
      %s84 = sadd.s32 %s83, 1
      %p87 = scmp.eq.s32.totalorder %s9, 3
      %p88 = scmp.ne.s32.totalorder %s83, %s85
      %p89 = scmp.eq.s32.totalorder %s9, 0
      %p90 = por %p88, %p89
      %p91 = scmp.ne.s32.totalorder %s83, %s85
      %p92 = scmp.eq.s32.totalorder %s14, 3
      %p93 = por %p91, %p92
      %p94 = scmp.ne.s32.totalorder %s85, %s86
      %p95 = scmp.eq.s32.totalorder %s14, 0
      %p96 = por %p94, %p95
      %p97 = scmp.ne.s32.totalorder %s85, %s86
      %p98 = scmp.eq.s32.totalorder %s15, 3
      %p99 = por %p97, %p98
      %p101 = scmp.ne.s32.totalorder %s86, %s100
      %p102 = scmp.eq.s32.totalorder %s15, 0
      %p103 = por %p101, %p102
      %s104 = ssub.s32 %s16, %s28
      %p105 = scmp.eq.s32.totalorder %s104, 0
      %s107 = sadd.s32 %s106, 1
      %s108 = scalar_select %p105, %s106, %s107
      %p111 = pneg %p105
      %p112 = scmp.eq.s32.totalorder %s9, 3
      %p113 = por %p111, %p112
      %p114 = scmp.ne.s32.totalorder %s106, %s109
      %p115 = scmp.eq.s32.totalorder %s9, 0
      %p116 = por %p114, %p115
      %p117 = scmp.ne.s32.totalorder %s106, %s109
      %p118 = scmp.eq.s32.totalorder %s14, 3
      %p119 = por %p117, %p118
      %p120 = scmp.ne.s32.totalorder %s109, %s110
      %p121 = scmp.eq.s32.totalorder %s14, 0
      %p122 = por %p120, %p121
      %p123 = scmp.ne.s32.totalorder %s109, %s110
      %p124 = scmp.eq.s32.totalorder %s15, 3
      %p125 = por %p123, %p124
      %p127 = scmp.ne.s32.totalorder %s110, %s126
      %p128 = scmp.eq.s32.totalorder %s15, 0
      %p129 = por %p127, %p128
      %p130 = scmp.le.s32.totalorder 1, %s9
      %p131 = scmp.lt.s32.totalorder %s9, 5
      %p132 = pnand %p130, %p131
      %p133 = pneg %p132
      // Predicated region
      $region9: #{decoder_forward.1} parent=5 // pred_check
        _
      $region10: #{decoder_forward.1} parent=5 // pred_check_branch
        %135 = sbr.rel (%p132) target = $region12
      $region11: #{decoder_forward.1} parent=5 // pred_region
        %s136 = ssub.s32 %s9, 1
        // Predicated region
        $region13: #{decoder_forward.1} parent=11 // pred_check
          %p137 = pneg %p96
        $region14: #{decoder_forward.1} parent=11 // pred_check_branch
          %139 = sbr.rel (%p137) target = $region16
        $region15: #{decoder_forward.1} parent=11 // pred_region
          _
        $region16: #{decoder_forward.1} parent=11 // pred_fallthru
          _
      $region12: #{decoder_forward.1} parent=5 // pred_fallthru
        _
      %p140 = scmp.lt.s32.totalorder %s9, 4
      // Predicated region
      $region17: #{decoder_forward.1} parent=5 // pred_check
        %p141 = pneg %p140
      $region18: #{decoder_forward.1} parent=5 // pred_check_branch
        %143 = sbr.rel (%p141) target = $region20
      $region19: #{decoder_forward.1} parent=5 // pred_region
        // Predicated region
        $region21: #{decoder_forward.1} parent=19 // pred_check
          %p144 = pneg %p43
        $region22: #{decoder_forward.1} parent=19 // pred_check_branch
          %146 = sbr.rel (%p144) target = $region24
        $region23: #{decoder_forward.1} parent=19 // pred_region
          %s147 = sand.u32 %s33, 1
          %s148 = sand.u32 %s33, 1
          %s149 = smul.addr %s148, 512
          %s150 = scalar_lea.vmem [#allocation3], %s149
          %s151 = smul.u32 32, %s16
          %s152 = smul.u32 2, %s17
          %s153 = smul.addr %s151, 4
          %s154 = sadd.s32 %s152, %s153
          %s155 = smul.addr %s154, 8
          %s156 = scalar_lea.vmem %s0, %s155
          // Predicated region
          $region25: #{decoder_forward.1} parent=23 // pred_check
            _
          $region26: #{decoder_forward.1} parent=23 // pred_check_branch
            %158 = sbr.rel (0) target = $region28
          $region27: #{decoder_forward.1} parent=23 // pred_region
            // Predicated region
            $region29: #{decoder_forward.1} parent=27 // pred_check
              _
            $region30: #{decoder_forward.1} parent=27 // pred_check_branch
              %160 = sbr.rel (0) target = $region32
            $region31: #{decoder_forward.1} parent=27 // pred_region
              loop: start=0, step=1, limit=1
              $region33: #{decoder_forward.1} parent=31 // loop_pre_header
                _
              $region34: #{decoder_forward.1} parent=31 // loop_header
                %s162 = sphi 0, %s166
                %p163 = scmp.ge.s32.totalorder %s162, 1
                %s167 = sphi %s156, %s156
                %s168 = sphi %s150, %s150
              $region35: #{decoder_forward.1} parent=31 // loop_header_branch
                %165 = sbr.rel (%p163) target = $region39
              $region36: #{decoder_forward.1} parent=31 // loop_body
                %v169 = vld [vmem:[%s167] sm:$0xff]
                %170 = vst [vmem:[%s168] sm:$0xff] %v169
                %v171 = vld [vmem:[%s167 + $0x8] sm:$0xff]
                %172 = vst [vmem:[%s168 + $0x8] sm:$0xff] %v171
                %v173 = vld [vmem:[%s167 + $0x20] sm:$0xff]
                %174 = vst [vmem:[%s168 + $0x10] sm:$0xff] %v173
                %v175 = vld [vmem:[%s167 + $0x28] sm:$0xff]
                %176 = vst [vmem:[%s168 + $0x18] sm:$0xff] %v175
                %v177 = vld [vmem:[%s167 + $0x40] sm:$0xff]
                %178 = vst [vmem:[%s168 + $0x20] sm:$0xff] %v177
                %v179 = vld [vmem:[%s167 + $0x48] sm:$0xff]
                %180 = vst [vmem:[%s168 + $0x28] sm:$0xff] %v179
                %v181 = vld [vmem:[%s167 + $0x60] sm:$0xff]
                %182 = vst [vmem:[%s168 + $0x30] sm:$0xff] %v181
                %v183 = vld [vmem:[%s167 + $0x68] sm:$0xff]
                %184 = vst [vmem:[%s168 + $0x38] sm:$0xff] %v183
                %v185 = vld [vmem:[%s167 + $0x80] sm:$0xff]
                %186 = vst [vmem:[%s168 + $0x40] sm:$0xff] %v185
                %v187 = vld [vmem:[%s167 + $0x88] sm:$0xff]
                %188 = vst [vmem:[%s168 + $0x48] sm:$0xff] %v187
                %v189 = vld [vmem:[%s167 + $0xa0] sm:$0xff]
                %190 = vst [vmem:[%s168 + $0x50] sm:$0xff] %v189
                %v191 = vld [vmem:[%s167 + $0xa8] sm:$0xff]
                %192 = vst [vmem:[%s168 + $0x58] sm:$0xff] %v191
                %v193 = vld [vmem:[%s167 + $0xc0] sm:$0xff]
                %194 = vst [vmem:[%s168 + $0x60] sm:$0xff] %v193
                %v195 = vld [vmem:[%s167 + $0xc8] sm:$0xff]
                %196 = vst [vmem:[%s168 + $0x68] sm:$0xff] %v195
                %v197 = vld [vmem:[%s167 + $0xe0] sm:$0xff]
                %198 = vst [vmem:[%s168 + $0x70] sm:$0xff] %v197
                %v199 = vld [vmem:[%s167 + $0xe8] sm:$0xff]
                %200 = vst [vmem:[%s168 + $0x78] sm:$0xff] %v199
                %v201 = vld [vmem:[%s167 + $0x100] sm:$0xff]
                %202 = vst [vmem:[%s168 + $0x80] sm:$0xff] %v201
                %v203 = vld [vmem:[%s167 + $0x108] sm:$0xff]
                %204 = vst [vmem:[%s168 + $0x88] sm:$0xff] %v203
                %v205 = vld [vmem:[%s167 + $0x120] sm:$0xff]
                %206 = vst [vmem:[%s168 + $0x90] sm:$0xff] %v205
                %v207 = vld [vmem:[%s167 + $0x128] sm:$0xff]
                %208 = vst [vmem:[%s168 + $0x98] sm:$0xff] %v207
                %v209 = vld [vmem:[%s167 + $0x140] sm:$0xff]
                %210 = vst [vmem:[%s168 + $0xa0] sm:$0xff] %v209
                %v211 = vld [vmem:[%s167 + $0x148] sm:$0xff]
                %212 = vst [vmem:[%s168 + $0xa8] sm:$0xff] %v211
                %v213 = vld [vmem:[%s167 + $0x160] sm:$0xff]
                %214 = vst [vmem:[%s168 + $0xb0] sm:$0xff] %v213
                %v215 = vld [vmem:[%s167 + $0x168] sm:$0xff]
                %216 = vst [vmem:[%s168 + $0xb8] sm:$0xff] %v215
                %v217 = vld [vmem:[%s167 + $0x180] sm:$0xff]
                %218 = vst [vmem:[%s168 + $0xc0] sm:$0xff] %v217
                %v219 = vld [vmem:[%s167 + $0x188] sm:$0xff]
                %220 = vst [vmem:[%s168 + $0xc8] sm:$0xff] %v219
                %v221 = vld [vmem:[%s167 + $0x1a0] sm:$0xff]
                %222 = vst [vmem:[%s168 + $0xd0] sm:$0xff] %v221
                %v223 = vld [vmem:[%s167 + $0x1a8] sm:$0xff]
                %224 = vst [vmem:[%s168 + $0xd8] sm:$0xff] %v223
                %v225 = vld [vmem:[%s167 + $0x1c0] sm:$0xff]
                %226 = vst [vmem:[%s168 + $0xe0] sm:$0xff] %v225
                %v227 = vld [vmem:[%s167 + $0x1c8] sm:$0xff]
                %228 = vst [vmem:[%s168 + $0xe8] sm:$0xff] %v227
                %v229 = vld [vmem:[%s167 + $0x1e0] sm:$0xff]
                %230 = vst [vmem:[%s168 + $0xf0] sm:$0xff] %v229
                %v231 = vld [vmem:[%s167 + $0x1e8] sm:$0xff]
                %232 = vst [vmem:[%s168 + $0xf8] sm:$0xff] %v231
                %v233 = vld [vmem:[%s167 + $0x200] sm:$0xff]
                %234 = vst [vmem:[%s168 + $0x100] sm:$0xff] %v233
                %v235 = vld [vmem:[%s167 + $0x208] sm:$0xff]
                %236 = vst [vmem:[%s168 + $0x108] sm:$0xff] %v235
                %v237 = vld [vmem:[%s167 + $0x220] sm:$0xff]
                %238 = vst [vmem:[%s168 + $0x110] sm:$0xff] %v237
                %v239 = vld [vmem:[%s167 + $0x228] sm:$0xff]
                %240 = vst [vmem:[%s168 + $0x118] sm:$0xff] %v239
                %v241 = vld [vmem:[%s167 + $0x240] sm:$0xff]
                %242 = vst [vmem:[%s168 + $0x120] sm:$0xff] %v241
                %v243 = vld [vmem:[%s167 + $0x248] sm:$0xff]
                %244 = vst [vmem:[%s168 + $0x128] sm:$0xff] %v243
                %v245 = vld [vmem:[%s167 + $0x260] sm:$0xff]
                %246 = vst [vmem:[%s168 + $0x130] sm:$0xff] %v245
                %v247 = vld [vmem:[%s167 + $0x268] sm:$0xff]
                %248 = vst [vmem:[%s168 + $0x138] sm:$0xff] %v247
                %v249 = vld [vmem:[%s167 + $0x280] sm:$0xff]
                %250 = vst [vmem:[%s168 + $0x140] sm:$0xff] %v249
                %v251 = vld [vmem:[%s167 + $0x288] sm:$0xff]
                %252 = vst [vmem:[%s168 + $0x148] sm:$0xff] %v251
                %v253 = vld [vmem:[%s167 + $0x2a0] sm:$0xff]
                %254 = vst [vmem:[%s168 + $0x150] sm:$0xff] %v253
                %v255 = vld [vmem:[%s167 + $0x2a8] sm:$0xff]
                %256 = vst [vmem:[%s168 + $0x158] sm:$0xff] %v255
                %v257 = vld [vmem:[%s167 + $0x2c0] sm:$0xff]
                %258 = vst [vmem:[%s168 + $0x160] sm:$0xff] %v257
                %v259 = vld [vmem:[%s167 + $0x2c8] sm:$0xff]
                %260 = vst [vmem:[%s168 + $0x168] sm:$0xff] %v259
                %v261 = vld [vmem:[%s167 + $0x2e0] sm:$0xff]
                %262 = vst [vmem:[%s168 + $0x170] sm:$0xff] %v261
                %v263 = vld [vmem:[%s167 + $0x2e8] sm:$0xff]
                %264 = vst [vmem:[%s168 + $0x178] sm:$0xff] %v263
                %v265 = vld [vmem:[%s167 + $0x300] sm:$0xff]
                %266 = vst [vmem:[%s168 + $0x180] sm:$0xff] %v265
                %v267 = vld [vmem:[%s167 + $0x308] sm:$0xff]
                %268 = vst [vmem:[%s168 + $0x188] sm:$0xff] %v267
                %v269 = vld [vmem:[%s167 + $0x320] sm:$0xff]
                %270 = vst [vmem:[%s168 + $0x190] sm:$0xff] %v269
                %v271 = vld [vmem:[%s167 + $0x328] sm:$0xff]
                %272 = vst [vmem:[%s168 + $0x198] sm:$0xff] %v271
                %v273 = vld [vmem:[%s167 + $0x340] sm:$0xff]
                %274 = vst [vmem:[%s168 + $0x1a0] sm:$0xff] %v273
                %v275 = vld [vmem:[%s167 + $0x348] sm:$0xff]
                %276 = vst [vmem:[%s168 + $0x1a8] sm:$0xff] %v275
                %v277 = vld [vmem:[%s167 + $0x360] sm:$0xff]
                %278 = vst [vmem:[%s168 + $0x1b0] sm:$0xff] %v277
                %v279 = vld [vmem:[%s167 + $0x368] sm:$0xff]
                %280 = vst [vmem:[%s168 + $0x1b8] sm:$0xff] %v279
                %v281 = vld [vmem:[%s167 + $0x380] sm:$0xff]
                %282 = vst [vmem:[%s168 + $0x1c0] sm:$0xff] %v281
                %v283 = vld [vmem:[%s167 + $0x388] sm:$0xff]
                %284 = vst [vmem:[%s168 + $0x1c8] sm:$0xff] %v283
                %v285 = vld [vmem:[%s167 + $0x3a0] sm:$0xff]
                %286 = vst [vmem:[%s168 + $0x1d0] sm:$0xff] %v285
                %v287 = vld [vmem:[%s167 + $0x3a8] sm:$0xff]
                %288 = vst [vmem:[%s168 + $0x1d8] sm:$0xff] %v287
                %v289 = vld [vmem:[%s167 + $0x3c0] sm:$0xff]
                %290 = vst [vmem:[%s168 + $0x1e0] sm:$0xff] %v289
                %v291 = vld [vmem:[%s167 + $0x3c8] sm:$0xff]
                %292 = vst [vmem:[%s168 + $0x1e8] sm:$0xff] %v291
                %v293 = vld [vmem:[%s167 + $0x3e0] sm:$0xff]
                %294 = vst [vmem:[%s168 + $0x1f0] sm:$0xff] %v293
                %v295 = vld [vmem:[%s167 + $0x3e8] sm:$0xff]
                %296 = vst [vmem:[%s168 + $0x1f8] sm:$0xff] %v295
              $region37: #{decoder_forward.1} parent=31 // loop_footer
                %s166 = sadd.s32 1, %s162
              $region38: #{decoder_forward.1} parent=31 // loop_footer_branch
                %161 = sbr.rel target = $region34
              $region39: #{decoder_forward.1} parent=31 // loop_exit
                _
            $region32: #{decoder_forward.1} parent=27 // pred_fallthru
              _
            // Predicated region
            $region40: #{decoder_forward.1} parent=27 // pred_check
              _
            $region41: #{decoder_forward.1} parent=27 // pred_check_branch
              %298 = sbr.rel target = $region43
            $region42: #{decoder_forward.1} parent=27 // pred_region
              _
            $region43: #{decoder_forward.1} parent=27 // pred_fallthru
              _
          $region28: #{decoder_forward.1} parent=23 // pred_fallthru
            _
          %299 = vnop
        $region24: #{decoder_forward.1} parent=19 // pred_fallthru
          _
        // Predicated region
        $region44: #{decoder_forward.1} parent=19 // pred_check
          %p300 = pneg %p69
        $region45: #{decoder_forward.1} parent=19 // pred_check_branch
          %302 = sbr.rel (%p300) target = $region47
        $region46: #{decoder_forward.1} parent=19 // pred_region
          %s303 = smul.u32 32, %s17
          %p304 = scmp.lt.s32.totalorder %s303, 63
          %s305 = scalar_select %p304, %s303, 63
          %s306 = smul.addr %s305, 8
          %s307 = scalar_lea.vmem %s1, %s306
          %s308 = smul.u32 32, %s17
        $region47: #{decoder_forward.1} parent=19 // pred_fallthru
          _
      $region20: #{decoder_forward.1} parent=5 // pred_fallthru
        _
      %p309 = scmp.le.s32.totalorder 1, %s9
      %p310 = scmp.lt.s32.totalorder %s9, 5
      %p311 = pnand %p309, %p310
      %p312 = pneg %p311
      // Predicated region
      $region48: #{decoder_forward.1} parent=5 // pred_check
        _
      $region49: #{decoder_forward.1} parent=5 // pred_check_branch
        %314 = sbr.rel (%p311) target = $region51
      $region50: #{decoder_forward.1} parent=5 // pred_region
        %s315 = ssub.s32 %s9, 1
        %s316 = sand.u32 %s36, 1
        %s317 = sand.u32 %s36, 1
        %s318 = smul.addr %s317, 512
        %s319 = scalar_lea.vmem [#allocation3], %s318
        // Predicated region
        $region52: #{decoder_forward.1} parent=50 // pred_check
          %p320 = pneg %p49
        $region53: #{decoder_forward.1} parent=50 // pred_check_branch
          %322 = sbr.rel (%p320) target = $region55
        $region54: #{decoder_forward.1} parent=50 // pred_region
          _
        $region55: #{decoder_forward.1} parent=50 // pred_fallthru
          _
        %s323 = sand.u32 %s36, 1
        %s324 = sand.u32 %s36, 1
        %s325 = smul.addr %s324, 512
        %s326 = scalar_lea.vmem [#allocation3], %s325
        %p327 = pneg %p49
        %p328 = pneg %p46
        %s329 = smul.u32 32, %s19
        %p330 = scmp.lt.s32.totalorder %s329, 63
        %s331 = scalar_select %p330, %s329, 63
        %s332 = smul.addr %s331, 8
        %s333 = scalar_lea.vmem %s1, %s332
        %p334 = pneg %p75
        %p335 = pneg %p72
        %p336 = pneg %p96
        %p337 = pneg %p93
        %p338 = pneg %p122
        %p339 = pneg %p119
        %s340 = smul.u32 32, %s18
        %p341 = scmp.lt.s32.totalorder %s340, 63
        %s342 = scalar_select %p341, %s340, 63
        %s343 = smul.addr %s342, 8
        %s344 = scalar_lea.vmem %s3, %s343
        %s345 = smul.u32 32, %s18
        %s346 = smul.u32 2, %s19
        %s347 = smul.u32 32, %s19
        %p348 = scmp.lt.s32.totalorder %s347, 63
        %s349 = scalar_select %p348, %s347, 63
        %s350 = smul.addr %s349, 8
        %s351 = scalar_lea.vmem %s1, %s350
        %s352 = smul.u32 32, %s19
        %s353 = smul.u32 32, %s18
        %p354 = scmp.lt.s32.totalorder %s353, 63
        %s355 = scalar_select %p354, %s353, 63
        %s356 = smul.addr %s355, 8
        %s357 = scalar_lea.vmem %s3, %s356
        %s358 = smul.u32 32, %s18
        %p359 = scmp.eq.s32.totalorder %s19, 0
        // Predicated region
        $region56: #{decoder_forward.1} parent=50 // pred_check
          %p360 = pneg %p359
        $region57: #{decoder_forward.1} parent=50 // pred_check_branch
          %362 = sbr.rel (%p360) target = $region59
        $region58: #{decoder_forward.1} parent=50 // pred_region
          %363 = vst [vmem:[#allocation2] sm:$0xff] 0.0
          %364 = vst [vmem:[#allocation2 + $0x8] sm:$0xff] 0.0
          %365 = vst [vmem:[#allocation2 + $0x10] sm:$0xff] 0.0
          %366 = vst [vmem:[#allocation2 + $0x18] sm:$0xff] 0.0
          %367 = vst [vmem:[#allocation2 + $0x20] sm:$0xff] 0.0
          %368 = vst [vmem:[#allocation2 + $0x28] sm:$0xff] 0.0
          %369 = vst [vmem:[#allocation2 + $0x30] sm:$0xff] 0.0
          %370 = vst [vmem:[#allocation2 + $0x38] sm:$0xff] 0.0
          %371 = vst [vmem:[#allocation2 + $0x40] sm:$0xff] 0.0
          %372 = vst [vmem:[#allocation2 + $0x48] sm:$0xff] 0.0
          %373 = vst [vmem:[#allocation2 + $0x50] sm:$0xff] 0.0
          %374 = vst [vmem:[#allocation2 + $0x58] sm:$0xff] 0.0
          %375 = vst [vmem:[#allocation2 + $0x60] sm:$0xff] 0.0
          %376 = vst [vmem:[#allocation2 + $0x68] sm:$0xff] 0.0
          %377 = vst [vmem:[#allocation2 + $0x70] sm:$0xff] 0.0
          %378 = vst [vmem:[#allocation2 + $0x78] sm:$0xff] 0.0
          %379 = vst [vmem:[#allocation2 + $0x80] sm:$0xff] 0.0
          %380 = vst [vmem:[#allocation2 + $0x88] sm:$0xff] 0.0
          %381 = vst [vmem:[#allocation2 + $0x90] sm:$0xff] 0.0
          %382 = vst [vmem:[#allocation2 + $0x98] sm:$0xff] 0.0
          %383 = vst [vmem:[#allocation2 + $0xa0] sm:$0xff] 0.0
          %384 = vst [vmem:[#allocation2 + $0xa8] sm:$0xff] 0.0
          %385 = vst [vmem:[#allocation2 + $0xb0] sm:$0xff] 0.0
          %386 = vst [vmem:[#allocation2 + $0xb8] sm:$0xff] 0.0
          %387 = vst [vmem:[#allocation2 + $0xc0] sm:$0xff] 0.0
          %388 = vst [vmem:[#allocation2 + $0xc8] sm:$0xff] 0.0
          %389 = vst [vmem:[#allocation2 + $0xd0] sm:$0xff] 0.0
          %390 = vst [vmem:[#allocation2 + $0xd8] sm:$0xff] 0.0
          %391 = vst [vmem:[#allocation2 + $0xe0] sm:$0xff] 0.0
          %392 = vst [vmem:[#allocation2 + $0xe8] sm:$0xff] 0.0
          %393 = vst [vmem:[#allocation2 + $0xf0] sm:$0xff] 0.0
          %394 = vst [vmem:[#allocation2 + $0xf8] sm:$0xff] 0.0
        $region59: #{decoder_forward.1} parent=50 // pred_fallthru
          _
        %v395 = vld [vmem:[%s351] sm:$0xff]
        %v396 = vld [vmem:[%s351 + $0x8] sm:$0xff]
        %v397 = vld [vmem:[%s351 + $0x10] sm:$0xff]
        %v398 = vld [vmem:[%s351 + $0x18] sm:$0xff]
        %v399 = vld [vmem:[%s351 + $0x20] sm:$0xff]
        %v400 = vld [vmem:[%s351 + $0x28] sm:$0xff]
        %v401 = vld [vmem:[%s351 + $0x30] sm:$0xff]
        %v402 = vld [vmem:[%s351 + $0x38] sm:$0xff]
        %v403 = vld [vmem:[%s351 + $0x40] sm:$0xff]
        %v404 = vld [vmem:[%s351 + $0x48] sm:$0xff]
        %v405 = vld [vmem:[%s351 + $0x50] sm:$0xff]
        %v406 = vld [vmem:[%s351 + $0x58] sm:$0xff]
        %v407 = vld [vmem:[%s351 + $0x60] sm:$0xff]
        %v408 = vld [vmem:[%s351 + $0x68] sm:$0xff]
        %v409 = vld [vmem:[%s351 + $0x70] sm:$0xff]
        %v410 = vld [vmem:[%s351 + $0x78] sm:$0xff]
        %v411 = vld [vmem:[%s351 + $0x80] sm:$0xff]
        %v412 = vld [vmem:[%s351 + $0x88] sm:$0xff]
        %v413 = vld [vmem:[%s351 + $0x90] sm:$0xff]
        %v414 = vld [vmem:[%s351 + $0x98] sm:$0xff]
        %v415 = vld [vmem:[%s351 + $0xa0] sm:$0xff]
        %v416 = vld [vmem:[%s351 + $0xa8] sm:$0xff]
        %v417 = vld [vmem:[%s351 + $0xb0] sm:$0xff]
        %v418 = vld [vmem:[%s351 + $0xb8] sm:$0xff]
        %v419 = vld [vmem:[%s351 + $0xc0] sm:$0xff]
        %v420 = vld [vmem:[%s351 + $0xc8] sm:$0xff]
        %v421 = vld [vmem:[%s351 + $0xd0] sm:$0xff]
        %v422 = vld [vmem:[%s351 + $0xd8] sm:$0xff]
        %v423 = vld [vmem:[%s351 + $0xe0] sm:$0xff]
        %v424 = vld [vmem:[%s351 + $0xe8] sm:$0xff]
        %v425 = vld [vmem:[%s351 + $0xf0] sm:$0xff]
        %v426 = vld [vmem:[%s351 + $0xf8] sm:$0xff]
        %v427 = vld [vmem:[%s2] sm:$0xff]
        %v428 = vld [vmem:[%s2 + $0x8] sm:$0xff]
        %v429 = vld [vmem:[%s2 + $0x10] sm:$0xff]
        %v430 = vld [vmem:[%s2 + $0x18] sm:$0xff]
        %v431 = vld [vmem:[%s2 + $0x20] sm:$0xff]
        %v432 = vld [vmem:[%s2 + $0x28] sm:$0xff]
        %v433 = vld [vmem:[%s2 + $0x30] sm:$0xff]
        %v434 = vld [vmem:[%s2 + $0x38] sm:$0xff]
        %v435 = vld [vmem:[%s2 + $0x40] sm:$0xff]
        %v436 = vld [vmem:[%s2 + $0x48] sm:$0xff]
        %v437 = vld [vmem:[%s2 + $0x50] sm:$0xff]
        %v438 = vld [vmem:[%s2 + $0x58] sm:$0xff]
        %v439 = vld [vmem:[%s2 + $0x60] sm:$0xff]
        %v440 = vld [vmem:[%s2 + $0x68] sm:$0xff]
        %v441 = vld [vmem:[%s2 + $0x70] sm:$0xff]
        %v442 = vld [vmem:[%s2 + $0x78] sm:$0xff]
        %443 = vmatprep.subr.mxu0 0.0
        %444 = vmatpush1.msra.mxu0 %v427
        %445 = vmatprep.subr.mxu0 0.0
        %446 = vmatpush1.msra.mxu0 %v428
        %447 = vmatprep.subr.mxu0 0.0
        %448 = vmatpush1.msra.mxu0 %v429
        %449 = vmatprep.subr.mxu0 0.0
        %450 = vmatpush1.msra.mxu0 %v430
        %451 = vmatprep.subr.mxu0 0.0
        %452 = vmatpush1.msra.mxu0 %v431
        %453 = vmatprep.subr.mxu0 0.0
        %454 = vmatpush1.msra.mxu0 %v432
        %455 = vmatprep.subr.mxu0 0.0
        %456 = vmatpush1.msra.mxu0 %v433
        %457 = vmatprep.subr.mxu0 0.0
        %458 = vmatpush1.msra.mxu0 %v434
        %459 = vmatprep.subr.mxu0 0.0
        %460 = vmatpush1.msra.mxu0 %v435
        %461 = vmatprep.subr.mxu0 0.0
        %462 = vmatpush1.msra.mxu0 %v436
        %463 = vmatprep.subr.mxu0 0.0
        %464 = vmatpush1.msra.mxu0 %v437
        %465 = vmatprep.subr.mxu0 0.0
        %466 = vmatpush1.msra.mxu0 %v438
        %467 = vmatprep.subr.mxu0 0.0
        %468 = vmatpush1.msra.mxu0 %v439
        %469 = vmatprep.subr.mxu0 0.0
        %470 = vmatpush1.msra.mxu0 %v440
        %471 = vmatprep.subr.mxu0 0.0
        %472 = vmatpush1.msra.mxu0 %v441
        %473 = vmatprep.subr.mxu0 0.0
        %474 = vmatpush1.msra.mxu0 %v442
        %475 = vmatprep.subr.mxu0 0.0
        %476 = vmatpush1.msra.mxu0 0.0
        %477 = vmatprep.subr.mxu0 0.0
        %478 = vmatpush1.msra.mxu0 0.0
        %479 = vmatprep.subr.mxu0 0.0
        %480 = vmatpush1.msra.mxu0 0.0
        %481 = vmatprep.subr.mxu0 0.0
        %482 = vmatpush1.msra.mxu0 0.0
        %483 = vmatprep.subr.mxu0 0.0
        %484 = vmatpush1.msra.mxu0 0.0
        %485 = vmatprep.subr.mxu0 0.0
        %486 = vmatpush1.msra.mxu0 0.0
        %487 = vmatprep.subr.mxu0 0.0
        %488 = vmatpush1.msra.mxu0 0.0
        %489 = vmatprep.subr.mxu0 0.0
        %490 = vmatpush1.msra.mxu0 0.0
        %491 = vmatprep.subr.mxu0 0.0
        %492 = vmatpush1.msra.mxu0 0.0
        %493 = vmatprep.subr.mxu0 0.0
        %494 = vmatpush1.msra.mxu0 0.0
        %495 = vmatprep.subr.mxu0 0.0
        %496 = vmatpush1.msra.mxu0 0.0
        %497 = vmatprep.subr.mxu0 0.0
        %498 = vmatpush1.msra.mxu0 0.0
        %499 = vmatprep.subr.mxu0 0.0
        %500 = vmatpush1.msra.mxu0 0.0
        %501 = vmatprep.subr.mxu0 0.0
        %502 = vmatpush1.msra.mxu0 0.0
        %503 = vmatprep.subr.mxu0 0.0
        %504 = vmatpush1.msra.mxu0 0.0
        %505 = vmatprep.subr.mxu0 0.0
        %506 = vmatpush1.msra.mxu0 0.0
        %507 = vmatprep.mubr.f32.mxu0 0.0
        %508 = vmatmul.mubr.f32.gmra.mrb[0].mxu0 %v395
        %v509 = vpop.f32.mrb[0].mxu0
        %v510 = vadd.f32 0.0, %v509
        %v511 = vpop.f32.mrb[0].mxu0
        %512 = vmatprep.mubr.f32.mxu0 0.0
        %513 = vmatmul.mubr.f32.gmra.mrb[0].mxu0 %v396
        %v514 = vpop.f32.mrb[0].mxu0
        %v515 = vadd.f32 0.0, %v514
        %v516 = vpop.f32.mrb[0].mxu0
        %517 = vmatprep.mubr.f32.mxu0 0.0
        %518 = vmatmul.mubr.f32.gmra.mrb[0].mxu0 %v397
        %v519 = vpop.f32.mrb[0].mxu0
        %v520 = vadd.f32 0.0, %v519
        %v521 = vpop.f32.mrb[0].mxu0
        %522 = vmatprep.mubr.f32.mxu0 0.0
        %523 = vmatmul.mubr.f32.gmra.mrb[0].mxu0 %v398
        %v524 = vpop.f32.mrb[0].mxu0
        %v525 = vadd.f32 0.0, %v524
        %v526 = vpop.f32.mrb[0].mxu0
        %527 = vmatprep.mubr.f32.mxu0 0.0
        %528 = vmatmul.mubr.f32.gmra.mrb[0].mxu0 %v399
        %v529 = vpop.f32.mrb[0].mxu0
        %v530 = vadd.f32 0.0, %v529
        %v531 = vpop.f32.mrb[0].mxu0
        %532 = vmatprep.mubr.f32.mxu0 0.0
        %533 = vmatmul.mubr.f32.gmra.mrb[0].mxu0 %v400
        %v534 = vpop.f32.mrb[0].mxu0
        %v535 = vadd.f32 0.0, %v534
        %v536 = vpop.f32.mrb[0].mxu0
        %537 = vmatprep.mubr.f32.mxu0 0.0
        %538 = vmatmul.mubr.f32.gmra.mrb[0].mxu0 %v401
        %v539 = vpop.f32.mrb[0].mxu0
        %v540 = vadd.f32 0.0, %v539
        %v541 = vpop.f32.mrb[0].mxu0
        %542 = vmatprep.mubr.f32.mxu0 0.0
        %543 = vmatmul.mubr.f32.gmra.mrb[0].mxu0 %v402
        %v544 = vpop.f32.mrb[0].mxu0
        %v545 = vadd.f32 0.0, %v544
        %v546 = vpop.f32.mrb[0].mxu0
        %547 = vmatprep.mubr.f32.mxu0 0.0
        %548 = vmatmul.mubr.f32.gmra.mrb[0].mxu0 %v403
        %v549 = vpop.f32.mrb[0].mxu0
        %v550 = vadd.f32 0.0, %v549
        %v551 = vpop.f32.mrb[0].mxu0
        %552 = vmatprep.mubr.f32.mxu0 0.0
        %553 = vmatmul.mubr.f32.gmra.mrb[0].mxu0 %v404
        %v554 = vpop.f32.mrb[0].mxu0
        %v555 = vadd.f32 0.0, %v554
        %v556 = vpop.f32.mrb[0].mxu0
        %557 = vmatprep.mubr.f32.mxu0 0.0
        %558 = vmatmul.mubr.f32.gmra.mrb[0].mxu0 %v405
        %v559 = vpop.f32.mrb[0].mxu0
        %v560 = vadd.f32 0.0, %v559
        %v561 = vpop.f32.mrb[0].mxu0
        %562 = vmatprep.mubr.f32.mxu0 0.0
        %563 = vmatmul.mubr.f32.gmra.mrb[0].mxu0 %v406
        %v564 = vpop.f32.mrb[0].mxu0
        %v565 = vadd.f32 0.0, %v564
        %v566 = vpop.f32.mrb[0].mxu0
        %567 = vmatprep.mubr.f32.mxu0 0.0
        %568 = vmatmul.mubr.f32.gmra.mrb[0].mxu0 %v407
        %v569 = vpop.f32.mrb[0].mxu0
        %v570 = vadd.f32 0.0, %v569
        %v571 = vpop.f32.mrb[0].mxu0
        %572 = vmatprep.mubr.f32.mxu0 0.0
        %573 = vmatmul.mubr.f32.gmra.mrb[0].mxu0 %v408
        %v574 = vpop.f32.mrb[0].mxu0
        %v575 = vadd.f32 0.0, %v574
        %v576 = vpop.f32.mrb[0].mxu0
        %577 = vmatprep.mubr.f32.mxu0 0.0
        %578 = vmatmul.mubr.f32.gmra.mrb[0].mxu0 %v409
        %v579 = vpop.f32.mrb[0].mxu0
        %v580 = vadd.f32 0.0, %v579
        %v581 = vpop.f32.mrb[0].mxu0
        %582 = vmatprep.mubr.f32.mxu0 0.0
        %583 = vmatmul.mubr.f32.gmra.mrb[0].mxu0 %v410
        %v584 = vpop.f32.mrb[0].mxu0
        %v585 = vadd.f32 0.0, %v584
        %v586 = vpop.f32.mrb[0].mxu0
        %587 = vmatprep.mubr.f32.mxu0 0.0
        %588 = vmatmul.mubr.f32.gmra.mrb[0].mxu0 %v411
        %v589 = vpop.f32.mrb[0].mxu0
        %v590 = vadd.f32 0.0, %v589
        %v591 = vpop.f32.mrb[0].mxu0
        %592 = vmatprep.mubr.f32.mxu0 0.0
        %593 = vmatmul.mubr.f32.gmra.mrb[0].mxu0 %v412
        %v594 = vpop.f32.mrb[0].mxu0
        %v595 = vadd.f32 0.0, %v594
        %v596 = vpop.f32.mrb[0].mxu0
        %597 = vmatprep.mubr.f32.mxu0 0.0
        %598 = vmatmul.mubr.f32.gmra.mrb[0].mxu0 %v413
        %v599 = vpop.f32.mrb[0].mxu0
        %v600 = vadd.f32 0.0, %v599
        %v601 = vpop.f32.mrb[0].mxu0
        %602 = vmatprep.mubr.f32.mxu0 0.0
        %603 = vmatmul.mubr.f32.gmra.mrb[0].mxu0 %v414
        %v604 = vpop.f32.mrb[0].mxu0
        %v605 = vadd.f32 0.0, %v604
        %v606 = vpop.f32.mrb[0].mxu0
        %607 = vmatprep.mubr.f32.mxu0 0.0
        %608 = vmatmul.mubr.f32.gmra.mrb[0].mxu0 %v415
        %v609 = vpop.f32.mrb[0].mxu0
        %v610 = vadd.f32 0.0, %v609
        %v611 = vpop.f32.mrb[0].mxu0
        %612 = vmatprep.mubr.f32.mxu0 0.0
        %613 = vmatmul.mubr.f32.gmra.mrb[0].mxu0 %v416
        %v614 = vpop.f32.mrb[0].mxu0
        %v615 = vadd.f32 0.0, %v614
        %v616 = vpop.f32.mrb[0].mxu0
        %617 = vmatprep.mubr.f32.mxu0 0.0
        %618 = vmatmul.mubr.f32.gmra.mrb[0].mxu0 %v417
        %v619 = vpop.f32.mrb[0].mxu0
        %v620 = vadd.f32 0.0, %v619
        %v621 = vpop.f32.mrb[0].mxu0
        %622 = vmatprep.mubr.f32.mxu0 0.0
        %623 = vmatmul.mubr.f32.gmra.mrb[0].mxu0 %v418
        %v624 = vpop.f32.mrb[0].mxu0
        %v625 = vadd.f32 0.0, %v624
        %v626 = vpop.f32.mrb[0].mxu0
        %627 = vmatprep.mubr.f32.mxu0 0.0
        %628 = vmatmul.mubr.f32.gmra.mrb[0].mxu0 %v419
        %v629 = vpop.f32.mrb[0].mxu0
        %v630 = vadd.f32 0.0, %v629
        %v631 = vpop.f32.mrb[0].mxu0
        %632 = vmatprep.mubr.f32.mxu0 0.0
        %633 = vmatmul.mubr.f32.gmra.mrb[0].mxu0 %v420
        %v634 = vpop.f32.mrb[0].mxu0
        %v635 = vadd.f32 0.0, %v634
        %v636 = vpop.f32.mrb[0].mxu0
        %637 = vmatprep.mubr.f32.mxu0 0.0
        %638 = vmatmul.mubr.f32.gmra.mrb[0].mxu0 %v421
        %v639 = vpop.f32.mrb[0].mxu0
        %v640 = vadd.f32 0.0, %v639
        %v641 = vpop.f32.mrb[0].mxu0
        %642 = vmatprep.mubr.f32.mxu0 0.0
        %643 = vmatmul.mubr.f32.gmra.mrb[0].mxu0 %v422
        %v644 = vpop.f32.mrb[0].mxu0
        %v645 = vadd.f32 0.0, %v644
        %v646 = vpop.f32.mrb[0].mxu0
        %647 = vmatprep.mubr.f32.mxu0 0.0
        %648 = vmatmul.mubr.f32.gmra.mrb[0].mxu0 %v423
        %v649 = vpop.f32.mrb[0].mxu0
        %v650 = vadd.f32 0.0, %v649
        %v651 = vpop.f32.mrb[0].mxu0
        %652 = vmatprep.mubr.f32.mxu0 0.0
        %653 = vmatmul.mubr.f32.gmra.mrb[0].mxu0 %v424
        %v654 = vpop.f32.mrb[0].mxu0
        %v655 = vadd.f32 0.0, %v654
        %v656 = vpop.f32.mrb[0].mxu0
        %657 = vmatprep.mubr.f32.mxu0 0.0
        %658 = vmatmul.mubr.f32.gmra.mrb[0].mxu0 %v425
        %v659 = vpop.f32.mrb[0].mxu0
        %v660 = vadd.f32 0.0, %v659
        %v661 = vpop.f32.mrb[0].mxu0
        %662 = vmatprep.mubr.f32.mxu0 0.0
        %663 = vmatmul.mubr.f32.gmra.mrb[0].mxu0 %v426
        %v664 = vpop.f32.mrb[0].mxu0
        %v665 = vadd.f32 0.0, %v664
        %v666 = vpop.f32.mrb[0].mxu0
        %667 = vdwg.mxu0
        %v668 = vld [vmem:[#allocation2] sm:$0xff]
        %v669 = vld [vmem:[#allocation2 + $0x8] sm:$0xff]
        %v670 = vld [vmem:[#allocation2 + $0x10] sm:$0xff]
        %v671 = vld [vmem:[#allocation2 + $0x18] sm:$0xff]
        %v672 = vld [vmem:[#allocation2 + $0x20] sm:$0xff]
        %v673 = vld [vmem:[#allocation2 + $0x28] sm:$0xff]
        %v674 = vld [vmem:[#allocation2 + $0x30] sm:$0xff]
        %v675 = vld [vmem:[#allocation2 + $0x38] sm:$0xff]
        %v676 = vld [vmem:[#allocation2 + $0x40] sm:$0xff]
        %v677 = vld [vmem:[#allocation2 + $0x48] sm:$0xff]
        %v678 = vld [vmem:[#allocation2 + $0x50] sm:$0xff]
        %v679 = vld [vmem:[#allocation2 + $0x58] sm:$0xff]
        %v680 = vld [vmem:[#allocation2 + $0x60] sm:$0xff]
        %v681 = vld [vmem:[#allocation2 + $0x68] sm:$0xff]
        %v682 = vld [vmem:[#allocation2 + $0x70] sm:$0xff]
        %v683 = vld [vmem:[#allocation2 + $0x78] sm:$0xff]
        %v684 = vld [vmem:[#allocation2 + $0x80] sm:$0xff]
        %v685 = vld [vmem:[#allocation2 + $0x88] sm:$0xff]
        %v686 = vld [vmem:[#allocation2 + $0x90] sm:$0xff]
        %v687 = vld [vmem:[#allocation2 + $0x98] sm:$0xff]
        %v688 = vld [vmem:[#allocation2 + $0xa0] sm:$0xff]
        %v689 = vld [vmem:[#allocation2 + $0xa8] sm:$0xff]
        %v690 = vld [vmem:[#allocation2 + $0xb0] sm:$0xff]
        %v691 = vld [vmem:[#allocation2 + $0xb8] sm:$0xff]
        %v692 = vld [vmem:[#allocation2 + $0xc0] sm:$0xff]
        %v693 = vld [vmem:[#allocation2 + $0xc8] sm:$0xff]
        %v694 = vld [vmem:[#allocation2 + $0xd0] sm:$0xff]
        %v695 = vld [vmem:[#allocation2 + $0xd8] sm:$0xff]
        %v696 = vld [vmem:[#allocation2 + $0xe0] sm:$0xff]
        %v697 = vld [vmem:[#allocation2 + $0xe8] sm:$0xff]
        %v698 = vld [vmem:[#allocation2 + $0xf0] sm:$0xff]
        %v699 = vld [vmem:[#allocation2 + $0xf8] sm:$0xff]
        %v700 = vld [vmem:[%s319] sm:$0xff]
        %v701 = vld [vmem:[%s319 + $0x8] sm:$0xff]
        %v702 = vld [vmem:[%s319 + $0x10] sm:$0xff]
        %v703 = vld [vmem:[%s319 + $0x18] sm:$0xff]
        %v704 = vld [vmem:[%s319 + $0x20] sm:$0xff]
        %v705 = vld [vmem:[%s319 + $0x28] sm:$0xff]
        %v706 = vld [vmem:[%s319 + $0x30] sm:$0xff]
        %v707 = vld [vmem:[%s319 + $0x38] sm:$0xff]
        %v708 = vld [vmem:[%s319 + $0x40] sm:$0xff]
        %v709 = vld [vmem:[%s319 + $0x48] sm:$0xff]
        %v710 = vld [vmem:[%s319 + $0x50] sm:$0xff]
        %v711 = vld [vmem:[%s319 + $0x58] sm:$0xff]
        %v712 = vld [vmem:[%s319 + $0x60] sm:$0xff]
        %v713 = vld [vmem:[%s319 + $0x68] sm:$0xff]
        %v714 = vld [vmem:[%s319 + $0x70] sm:$0xff]
        %v715 = vld [vmem:[%s319 + $0x78] sm:$0xff]
        %v716 = vld [vmem:[%s319 + $0x80] sm:$0xff]
        %v717 = vld [vmem:[%s319 + $0x88] sm:$0xff]
        %v718 = vld [vmem:[%s319 + $0x90] sm:$0xff]
        %v719 = vld [vmem:[%s319 + $0x98] sm:$0xff]
        %v720 = vld [vmem:[%s319 + $0xa0] sm:$0xff]
        %v721 = vld [vmem:[%s319 + $0xa8] sm:$0xff]
        %v722 = vld [vmem:[%s319 + $0xb0] sm:$0xff]
        %v723 = vld [vmem:[%s319 + $0xb8] sm:$0xff]
        %v724 = vld [vmem:[%s319 + $0xc0] sm:$0xff]
        %v725 = vld [vmem:[%s319 + $0xc8] sm:$0xff]
        %v726 = vld [vmem:[%s319 + $0xd0] sm:$0xff]
        %v727 = vld [vmem:[%s319 + $0xd8] sm:$0xff]
        %v728 = vld [vmem:[%s319 + $0xe0] sm:$0xff]
        %v729 = vld [vmem:[%s319 + $0xe8] sm:$0xff]
        %v730 = vld [vmem:[%s319 + $0xf0] sm:$0xff]
        %v731 = vld [vmem:[%s319 + $0xf8] sm:$0xff]
        %v732 = vld [vmem:[%s319 + $0x100] sm:$0xff]
        %v733 = vld [vmem:[%s319 + $0x108] sm:$0xff]
        %v734 = vld [vmem:[%s319 + $0x110] sm:$0xff]
        %v735 = vld [vmem:[%s319 + $0x118] sm:$0xff]
        %v736 = vld [vmem:[%s319 + $0x120] sm:$0xff]
        %v737 = vld [vmem:[%s319 + $0x128] sm:$0xff]
        %v738 = vld [vmem:[%s319 + $0x130] sm:$0xff]
        %v739 = vld [vmem:[%s319 + $0x138] sm:$0xff]
        %v740 = vld [vmem:[%s319 + $0x140] sm:$0xff]
        %v741 = vld [vmem:[%s319 + $0x148] sm:$0xff]
        %v742 = vld [vmem:[%s319 + $0x150] sm:$0xff]
        %v743 = vld [vmem:[%s319 + $0x158] sm:$0xff]
        %v744 = vld [vmem:[%s319 + $0x160] sm:$0xff]
        %v745 = vld [vmem:[%s319 + $0x168] sm:$0xff]
        %v746 = vld [vmem:[%s319 + $0x170] sm:$0xff]
        %v747 = vld [vmem:[%s319 + $0x178] sm:$0xff]
        %v748 = vld [vmem:[%s319 + $0x180] sm:$0xff]
        %v749 = vld [vmem:[%s319 + $0x188] sm:$0xff]
        %v750 = vld [vmem:[%s319 + $0x190] sm:$0xff]
        %v751 = vld [vmem:[%s319 + $0x198] sm:$0xff]
        %v752 = vld [vmem:[%s319 + $0x1a0] sm:$0xff]
        %v753 = vld [vmem:[%s319 + $0x1a8] sm:$0xff]
        %v754 = vld [vmem:[%s319 + $0x1b0] sm:$0xff]
        %v755 = vld [vmem:[%s319 + $0x1b8] sm:$0xff]
        %v756 = vld [vmem:[%s319 + $0x1c0] sm:$0xff]
        %v757 = vld [vmem:[%s319 + $0x1c8] sm:$0xff]
        %v758 = vld [vmem:[%s319 + $0x1d0] sm:$0xff]
        %v759 = vld [vmem:[%s319 + $0x1d8] sm:$0xff]
        %v760 = vld [vmem:[%s319 + $0x1e0] sm:$0xff]
        %v761 = vld [vmem:[%s319 + $0x1e8] sm:$0xff]
        %v762 = vld [vmem:[%s319 + $0x1f0] sm:$0xff]
        %v763 = vld [vmem:[%s319 + $0x1f8] sm:$0xff]
        %764 = vmatprep.subr.mxu0 0.0
        %765 = vmatpush1.msra.mxu0 %v510
        %766 = vmatprep.subr.mxu0 0.0
        %767 = vmatpush1.msra.mxu0 %v515
        %768 = vmatprep.subr.mxu0 0.0
        %769 = vmatpush1.msra.mxu0 %v520
        %770 = vmatprep.subr.mxu0 0.0
        %771 = vmatpush1.msra.mxu0 %v525
        %772 = vmatprep.subr.mxu0 0.0
        %773 = vmatpush1.msra.mxu0 %v530
        %774 = vmatprep.subr.mxu0 0.0
        %775 = vmatpush1.msra.mxu0 %v535
        %776 = vmatprep.subr.mxu0 0.0
        %777 = vmatpush1.msra.mxu0 %v540
        %778 = vmatprep.subr.mxu0 0.0
        %779 = vmatpush1.msra.mxu0 %v545
        %780 = vmatprep.subr.mxu0 0.0
        %781 = vmatpush1.msra.mxu0 %v550
        %782 = vmatprep.subr.mxu0 0.0
        %783 = vmatpush1.msra.mxu0 %v555
        %784 = vmatprep.subr.mxu0 0.0
        %785 = vmatpush1.msra.mxu0 %v560
        %786 = vmatprep.subr.mxu0 0.0
        %787 = vmatpush1.msra.mxu0 %v565
        %788 = vmatprep.subr.mxu0 0.0
        %789 = vmatpush1.msra.mxu0 %v570
        %790 = vmatprep.subr.mxu0 0.0
        %791 = vmatpush1.msra.mxu0 %v575
        %792 = vmatprep.subr.mxu0 0.0
        %793 = vmatpush1.msra.mxu0 %v580
        %794 = vmatprep.subr.mxu0 0.0
        %795 = vmatpush1.msra.mxu0 %v585
        %796 = vmatprep.subr.mxu0 0.0
        %797 = vmatpush1.msra.mxu0 %v590
        %798 = vmatprep.subr.mxu0 0.0
        %799 = vmatpush1.msra.mxu0 %v595
        %800 = vmatprep.subr.mxu0 0.0
        %801 = vmatpush1.msra.mxu0 %v600
        %802 = vmatprep.subr.mxu0 0.0
        %803 = vmatpush1.msra.mxu0 %v605
        %804 = vmatprep.subr.mxu0 0.0
        %805 = vmatpush1.msra.mxu0 %v610
        %806 = vmatprep.subr.mxu0 0.0
        %807 = vmatpush1.msra.mxu0 %v615
        %808 = vmatprep.subr.mxu0 0.0
        %809 = vmatpush1.msra.mxu0 %v620
        %810 = vmatprep.subr.mxu0 0.0
        %811 = vmatpush1.msra.mxu0 %v625
        %812 = vmatprep.subr.mxu0 0.0
        %813 = vmatpush1.msra.mxu0 %v630
        %814 = vmatprep.subr.mxu0 0.0
        %815 = vmatpush1.msra.mxu0 %v635
        %816 = vmatprep.subr.mxu0 0.0
        %817 = vmatpush1.msra.mxu0 %v640
        %818 = vmatprep.subr.mxu0 0.0
        %819 = vmatpush1.msra.mxu0 %v645
        %820 = vmatprep.subr.mxu0 0.0
        %821 = vmatpush1.msra.mxu0 %v650
        %822 = vmatprep.subr.mxu0 0.0
        %823 = vmatpush1.msra.mxu0 %v655
        %824 = vmatprep.subr.mxu0 0.0
        %825 = vmatpush1.msra.mxu0 %v660
        %826 = vmatprep.subr.mxu0 0.0
        %827 = vmatpush1.msra.mxu0 %v665
        %828 = vmatprep.mubr.f32.mxu0 %v701
        %829 = vmatmul.mubr.f32.gmra.mrb[0].mxu0 %v700
        %v830 = vpop.f32.mrb[0].mxu0
        %v831 = vadd.f32 0.0, %v830
        %v832 = vpop.f32.mrb[0].mxu0
        %833 = vmatprep.mubr.f32.mxu0 %v703
        %834 = vmatmul.mubr.f32.gmra.mrb[0].mxu0 %v702
        %v835 = vpop.f32.mrb[0].mxu0
        %v836 = vadd.f32 0.0, %v835
        %v837 = vpop.f32.mrb[0].mxu0
        %838 = vmatprep.mubr.f32.mxu0 %v705
        %839 = vmatmul.mubr.f32.gmra.mrb[0].mxu0 %v704
        %v840 = vpop.f32.mrb[0].mxu0
        %v841 = vadd.f32 0.0, %v840
        %v842 = vpop.f32.mrb[0].mxu0
        %843 = vmatprep.mubr.f32.mxu0 %v707
        %844 = vmatmul.mubr.f32.gmra.mrb[0].mxu0 %v706
        %v845 = vpop.f32.mrb[0].mxu0
        %v846 = vadd.f32 0.0, %v845
        %v847 = vpop.f32.mrb[0].mxu0
        %848 = vmatprep.mubr.f32.mxu0 %v709
        %849 = vmatmul.mubr.f32.gmra.mrb[0].mxu0 %v708
        %v850 = vpop.f32.mrb[0].mxu0
        %v851 = vadd.f32 0.0, %v850
        %v852 = vpop.f32.mrb[0].mxu0
        %853 = vmatprep.mubr.f32.mxu0 %v711
        %854 = vmatmul.mubr.f32.gmra.mrb[0].mxu0 %v710
        %v855 = vpop.f32.mrb[0].mxu0
        %v856 = vadd.f32 0.0, %v855
        %v857 = vpop.f32.mrb[0].mxu0
        %858 = vmatprep.mubr.f32.mxu0 %v713
        %859 = vmatmul.mubr.f32.gmra.mrb[0].mxu0 %v712
        %v860 = vpop.f32.mrb[0].mxu0
        %v861 = vadd.f32 0.0, %v860
        %v862 = vpop.f32.mrb[0].mxu0
        %863 = vmatprep.mubr.f32.mxu0 %v715
        %864 = vmatmul.mubr.f32.gmra.mrb[0].mxu0 %v714
        %v865 = vpop.f32.mrb[0].mxu0
        %v866 = vadd.f32 0.0, %v865
        %v867 = vpop.f32.mrb[0].mxu0
        %868 = vmatprep.mubr.f32.mxu0 %v717
        %869 = vmatmul.mubr.f32.gmra.mrb[0].mxu0 %v716
        %v870 = vpop.f32.mrb[0].mxu0
        %v871 = vadd.f32 0.0, %v870
        %v872 = vpop.f32.mrb[0].mxu0
        %873 = vmatprep.mubr.f32.mxu0 %v719
        %874 = vmatmul.mubr.f32.gmra.mrb[0].mxu0 %v718
        %v875 = vpop.f32.mrb[0].mxu0
        %v876 = vadd.f32 0.0, %v875
        %v877 = vpop.f32.mrb[0].mxu0
        %878 = vmatprep.mubr.f32.mxu0 %v721
        %879 = vmatmul.mubr.f32.gmra.mrb[0].mxu0 %v720
        %v880 = vpop.f32.mrb[0].mxu0
        %v881 = vadd.f32 0.0, %v880
        %v882 = vpop.f32.mrb[0].mxu0
        %883 = vmatprep.mubr.f32.mxu0 %v723
        %884 = vmatmul.mubr.f32.gmra.mrb[0].mxu0 %v722
        %v885 = vpop.f32.mrb[0].mxu0
        %v886 = vadd.f32 0.0, %v885
        %v887 = vpop.f32.mrb[0].mxu0
        %888 = vmatprep.mubr.f32.mxu0 %v725
        %889 = vmatmul.mubr.f32.gmra.mrb[0].mxu0 %v724
        %v890 = vpop.f32.mrb[0].mxu0
        %v891 = vadd.f32 0.0, %v890
        %v892 = vpop.f32.mrb[0].mxu0
        %893 = vmatprep.mubr.f32.mxu0 %v727
        %894 = vmatmul.mubr.f32.gmra.mrb[0].mxu0 %v726
        %v895 = vpop.f32.mrb[0].mxu0
        %v896 = vadd.f32 0.0, %v895
        %v897 = vpop.f32.mrb[0].mxu0
        %898 = vmatprep.mubr.f32.mxu0 %v729
        %899 = vmatmul.mubr.f32.gmra.mrb[0].mxu0 %v728
        %v900 = vpop.f32.mrb[0].mxu0
        %v901 = vadd.f32 0.0, %v900
        %v902 = vpop.f32.mrb[0].mxu0
        %903 = vmatprep.mubr.f32.mxu0 %v731
        %904 = vmatmul.mubr.f32.gmra.mrb[0].mxu0 %v730
        %v905 = vpop.f32.mrb[0].mxu0
        %v906 = vadd.f32 0.0, %v905
        %v907 = vpop.f32.mrb[0].mxu0
        %908 = vmatprep.mubr.f32.mxu0 %v733
        %909 = vmatmul.mubr.f32.gmra.mrb[0].mxu0 %v732
        %v910 = vpop.f32.mrb[0].mxu0
        %v911 = vadd.f32 0.0, %v910
        %v912 = vpop.f32.mrb[0].mxu0
        %913 = vmatprep.mubr.f32.mxu0 %v735
        %914 = vmatmul.mubr.f32.gmra.mrb[0].mxu0 %v734
        %v915 = vpop.f32.mrb[0].mxu0
        %v916 = vadd.f32 0.0, %v915
        %v917 = vpop.f32.mrb[0].mxu0
        %918 = vmatprep.mubr.f32.mxu0 %v737
        %919 = vmatmul.mubr.f32.gmra.mrb[0].mxu0 %v736
        %v920 = vpop.f32.mrb[0].mxu0
        %v921 = vadd.f32 0.0, %v920
        %v922 = vpop.f32.mrb[0].mxu0
        %923 = vmatprep.mubr.f32.mxu0 %v739
        %924 = vmatmul.mubr.f32.gmra.mrb[0].mxu0 %v738
        %v925 = vpop.f32.mrb[0].mxu0
        %v926 = vadd.f32 0.0, %v925
        %v927 = vpop.f32.mrb[0].mxu0
        %928 = vmatprep.mubr.f32.mxu0 %v741
        %929 = vmatmul.mubr.f32.gmra.mrb[0].mxu0 %v740
        %v930 = vpop.f32.mrb[0].mxu0
        %v931 = vadd.f32 0.0, %v930
        %v932 = vpop.f32.mrb[0].mxu0
        %933 = vmatprep.mubr.f32.mxu0 %v743
        %934 = vmatmul.mubr.f32.gmra.mrb[0].mxu0 %v742
        %v935 = vpop.f32.mrb[0].mxu0
        %v936 = vadd.f32 0.0, %v935
        %v937 = vpop.f32.mrb[0].mxu0
        %938 = vmatprep.mubr.f32.mxu0 %v745
        %939 = vmatmul.mubr.f32.gmra.mrb[0].mxu0 %v744
        %v940 = vpop.f32.mrb[0].mxu0
        %v941 = vadd.f32 0.0, %v940
        %v942 = vpop.f32.mrb[0].mxu0
        %943 = vmatprep.mubr.f32.mxu0 %v747
        %944 = vmatmul.mubr.f32.gmra.mrb[0].mxu0 %v746
        %v945 = vpop.f32.mrb[0].mxu0
        %v946 = vadd.f32 0.0, %v945
        %v947 = vpop.f32.mrb[0].mxu0
        %948 = vmatprep.mubr.f32.mxu0 %v749
        %949 = vmatmul.mubr.f32.gmra.mrb[0].mxu0 %v748
        %v950 = vpop.f32.mrb[0].mxu0
        %v951 = vadd.f32 0.0, %v950
        %v952 = vpop.f32.mrb[0].mxu0
        %953 = vmatprep.mubr.f32.mxu0 %v751
        %954 = vmatmul.mubr.f32.gmra.mrb[0].mxu0 %v750
        %v955 = vpop.f32.mrb[0].mxu0
        %v956 = vadd.f32 0.0, %v955
        %v957 = vpop.f32.mrb[0].mxu0
        %958 = vmatprep.mubr.f32.mxu0 %v753
        %959 = vmatmul.mubr.f32.gmra.mrb[0].mxu0 %v752
        %v960 = vpop.f32.mrb[0].mxu0
        %v961 = vadd.f32 0.0, %v960
        %v962 = vpop.f32.mrb[0].mxu0
        %963 = vmatprep.mubr.f32.mxu0 %v755
        %964 = vmatmul.mubr.f32.gmra.mrb[0].mxu0 %v754
        %v965 = vpop.f32.mrb[0].mxu0
        %v966 = vadd.f32 0.0, %v965
        %v967 = vpop.f32.mrb[0].mxu0
        %968 = vmatprep.mubr.f32.mxu0 %v757
        %969 = vmatmul.mubr.f32.gmra.mrb[0].mxu0 %v756
        %v970 = vpop.f32.mrb[0].mxu0
        %v971 = vadd.f32 0.0, %v970
        %v972 = vpop.f32.mrb[0].mxu0
        %973 = vmatprep.mubr.f32.mxu0 %v759
        %974 = vmatmul.mubr.f32.gmra.mrb[0].mxu0 %v758
        %v975 = vpop.f32.mrb[0].mxu0
        %v976 = vadd.f32 0.0, %v975
        %v977 = vpop.f32.mrb[0].mxu0
        %978 = vmatprep.mubr.f32.mxu0 %v761
        %979 = vmatmul.mubr.f32.gmra.mrb[0].mxu0 %v760
        %v980 = vpop.f32.mrb[0].mxu0
        %v981 = vadd.f32 0.0, %v980
        %v982 = vpop.f32.mrb[0].mxu0
        %983 = vmatprep.mubr.f32.mxu0 %v763
        %984 = vmatmul.mubr.f32.gmra.mrb[0].mxu0 %v762
        %v985 = vpop.f32.mrb[0].mxu0
        %v986 = vadd.f32 0.0, %v985
        %v987 = vpop.f32.mrb[0].mxu0
        %988 = vdwg.mxu0
        %v989 = vadd.f32 %v668, %v831
        %v990 = vadd.f32 %v669, %v836
        %v991 = vadd.f32 %v670, %v841
        %v992 = vadd.f32 %v671, %v846
        %v993 = vadd.f32 %v672, %v851
        %v994 = vadd.f32 %v673, %v856
        %v995 = vadd.f32 %v674, %v861
        %v996 = vadd.f32 %v675, %v866
        %v997 = vadd.f32 %v676, %v871
        %v998 = vadd.f32 %v677, %v876
        %v999 = vadd.f32 %v678, %v881
        %v1000 = vadd.f32 %v679, %v886
        %v1001 = vadd.f32 %v680, %v891
        %v1002 = vadd.f32 %v681, %v896
        %v1003 = vadd.f32 %v682, %v901
        %v1004 = vadd.f32 %v683, %v906
        %v1005 = vadd.f32 %v684, %v911
        %v1006 = vadd.f32 %v685, %v916
        %v1007 = vadd.f32 %v686, %v921
        %v1008 = vadd.f32 %v687, %v926
        %v1009 = vadd.f32 %v688, %v931
        %v1010 = vadd.f32 %v689, %v936
        %v1011 = vadd.f32 %v690, %v941
        %v1012 = vadd.f32 %v691, %v946
        %v1013 = vadd.f32 %v692, %v951
        %v1014 = vadd.f32 %v693, %v956
        %v1015 = vadd.f32 %v694, %v961
        %v1016 = vadd.f32 %v695, %v966
        %v1017 = vadd.f32 %v696, %v971
        %v1018 = vadd.f32 %v697, %v976
        %v1019 = vadd.f32 %v698, %v981
        %v1020 = vadd.f32 %v699, %v986
        %1021 = vst [vmem:[#allocation2] sm:$0xff] %v989
        %1022 = vst [vmem:[#allocation2 + $0x8] sm:$0xff] %v990
        %1023 = vst [vmem:[#allocation2 + $0x10] sm:$0xff] %v991
        %1024 = vst [vmem:[#allocation2 + $0x18] sm:$0xff] %v992
        %1025 = vst [vmem:[#allocation2 + $0x20] sm:$0xff] %v993
        %1026 = vst [vmem:[#allocation2 + $0x28] sm:$0xff] %v994
        %1027 = vst [vmem:[#allocation2 + $0x30] sm:$0xff] %v995
        %1028 = vst [vmem:[#allocation2 + $0x38] sm:$0xff] %v996
        %1029 = vst [vmem:[#allocation2 + $0x40] sm:$0xff] %v997
        %1030 = vst [vmem:[#allocation2 + $0x48] sm:$0xff] %v998
        %1031 = vst [vmem:[#allocation2 + $0x50] sm:$0xff] %v999
        %1032 = vst [vmem:[#allocation2 + $0x58] sm:$0xff] %v1000
        %1033 = vst [vmem:[#allocation2 + $0x60] sm:$0xff] %v1001
        %1034 = vst [vmem:[#allocation2 + $0x68] sm:$0xff] %v1002
        %1035 = vst [vmem:[#allocation2 + $0x70] sm:$0xff] %v1003
        %1036 = vst [vmem:[#allocation2 + $0x78] sm:$0xff] %v1004
        %1037 = vst [vmem:[#allocation2 + $0x80] sm:$0xff] %v1005
        %1038 = vst [vmem:[#allocation2 + $0x88] sm:$0xff] %v1006
        %1039 = vst [vmem:[#allocation2 + $0x90] sm:$0xff] %v1007
        %1040 = vst [vmem:[#allocation2 + $0x98] sm:$0xff] %v1008
        %1041 = vst [vmem:[#allocation2 + $0xa0] sm:$0xff] %v1009
        %1042 = vst [vmem:[#allocation2 + $0xa8] sm:$0xff] %v1010
        %1043 = vst [vmem:[#allocation2 + $0xb0] sm:$0xff] %v1011
        %1044 = vst [vmem:[#allocation2 + $0xb8] sm:$0xff] %v1012
        %1045 = vst [vmem:[#allocation2 + $0xc0] sm:$0xff] %v1013
        %1046 = vst [vmem:[#allocation2 + $0xc8] sm:$0xff] %v1014
        %1047 = vst [vmem:[#allocation2 + $0xd0] sm:$0xff] %v1015
        %1048 = vst [vmem:[#allocation2 + $0xd8] sm:$0xff] %v1016
        %1049 = vst [vmem:[#allocation2 + $0xe0] sm:$0xff] %v1017
        %1050 = vst [vmem:[#allocation2 + $0xe8] sm:$0xff] %v1018
        %1051 = vst [vmem:[#allocation2 + $0xf0] sm:$0xff] %v1019
        %1052 = vst [vmem:[#allocation2 + $0xf8] sm:$0xff] %v1020
        %p1053 = scmp.eq.s32.totalorder %s19, 1
        // Predicated region
        $region60: #{decoder_forward.1} parent=50 // pred_check
          %p1054 = pneg %p1053
        $region61: #{decoder_forward.1} parent=50 // pred_check_branch
          %1056 = sbr.rel (%p1054) target = $region63
        $region62: #{decoder_forward.1} parent=50 // pred_region
          %v1057 = vld [vmem:[#allocation2] sm:$0xff]
          %v1058 = vld [vmem:[#allocation2 + $0x8] sm:$0xff]
          %v1059 = vld [vmem:[#allocation2 + $0x10] sm:$0xff]
          %v1060 = vld [vmem:[#allocation2 + $0x18] sm:$0xff]
          %v1061 = vld [vmem:[#allocation2 + $0x20] sm:$0xff]
          %v1062 = vld [vmem:[#allocation2 + $0x28] sm:$0xff]
          %v1063 = vld [vmem:[#allocation2 + $0x30] sm:$0xff]
          %v1064 = vld [vmem:[#allocation2 + $0x38] sm:$0xff]
          %v1065 = vld [vmem:[#allocation2 + $0x40] sm:$0xff]
          %v1066 = vld [vmem:[#allocation2 + $0x48] sm:$0xff]
          %v1067 = vld [vmem:[#allocation2 + $0x50] sm:$0xff]
          %v1068 = vld [vmem:[#allocation2 + $0x58] sm:$0xff]
          %v1069 = vld [vmem:[#allocation2 + $0x60] sm:$0xff]
          %v1070 = vld [vmem:[#allocation2 + $0x68] sm:$0xff]
          %v1071 = vld [vmem:[#allocation2 + $0x70] sm:$0xff]
          %v1072 = vld [vmem:[#allocation2 + $0x78] sm:$0xff]
          %v1073 = vld [vmem:[#allocation2 + $0x80] sm:$0xff]
          %v1074 = vld [vmem:[#allocation2 + $0x88] sm:$0xff]
          %v1075 = vld [vmem:[#allocation2 + $0x90] sm:$0xff]
          %v1076 = vld [vmem:[#allocation2 + $0x98] sm:$0xff]
          %v1077 = vld [vmem:[#allocation2 + $0xa0] sm:$0xff]
          %v1078 = vld [vmem:[#allocation2 + $0xa8] sm:$0xff]
          %v1079 = vld [vmem:[#allocation2 + $0xb0] sm:$0xff]
          %v1080 = vld [vmem:[#allocation2 + $0xb8] sm:$0xff]
          %v1081 = vld [vmem:[#allocation2 + $0xc0] sm:$0xff]
          %v1082 = vld [vmem:[#allocation2 + $0xc8] sm:$0xff]
          %v1083 = vld [vmem:[#allocation2 + $0xd0] sm:$0xff]
          %v1084 = vld [vmem:[#allocation2 + $0xd8] sm:$0xff]
          %v1085 = vld [vmem:[#allocation2 + $0xe0] sm:$0xff]
          %v1086 = vld [vmem:[#allocation2 + $0xe8] sm:$0xff]
          %v1087 = vld [vmem:[#allocation2 + $0xf0] sm:$0xff]
          %v1088 = vld [vmem:[#allocation2 + $0xf8] sm:$0xff]
          %1089 = vst [vmem:[%s357] sm:$0xff] %v1057
          %1090 = vst [vmem:[%s357 + $0x8] sm:$0xff] %v1058
          %1091 = vst [vmem:[%s357 + $0x10] sm:$0xff] %v1059
          %1092 = vst [vmem:[%s357 + $0x18] sm:$0xff] %v1060
          %1093 = vst [vmem:[%s357 + $0x20] sm:$0xff] %v1061
          %1094 = vst [vmem:[%s357 + $0x28] sm:$0xff] %v1062
          %1095 = vst [vmem:[%s357 + $0x30] sm:$0xff] %v1063
          %1096 = vst [vmem:[%s357 + $0x38] sm:$0xff] %v1064
          %1097 = vst [vmem:[%s357 + $0x40] sm:$0xff] %v1065
          %1098 = vst [vmem:[%s357 + $0x48] sm:$0xff] %v1066
          %1099 = vst [vmem:[%s357 + $0x50] sm:$0xff] %v1067
          %1100 = vst [vmem:[%s357 + $0x58] sm:$0xff] %v1068
          %1101 = vst [vmem:[%s357 + $0x60] sm:$0xff] %v1069
          %1102 = vst [vmem:[%s357 + $0x68] sm:$0xff] %v1070
          %1103 = vst [vmem:[%s357 + $0x70] sm:$0xff] %v1071
          %1104 = vst [vmem:[%s357 + $0x78] sm:$0xff] %v1072
          %1105 = vst [vmem:[%s357 + $0x80] sm:$0xff] %v1073
          %1106 = vst [vmem:[%s357 + $0x88] sm:$0xff] %v1074
          %1107 = vst [vmem:[%s357 + $0x90] sm:$0xff] %v1075
          %1108 = vst [vmem:[%s357 + $0x98] sm:$0xff] %v1076
          %1109 = vst [vmem:[%s357 + $0xa0] sm:$0xff] %v1077
          %1110 = vst [vmem:[%s357 + $0xa8] sm:$0xff] %v1078
          %1111 = vst [vmem:[%s357 + $0xb0] sm:$0xff] %v1079
          %1112 = vst [vmem:[%s357 + $0xb8] sm:$0xff] %v1080
          %1113 = vst [vmem:[%s357 + $0xc0] sm:$0xff] %v1081
          %1114 = vst [vmem:[%s357 + $0xc8] sm:$0xff] %v1082
          %1115 = vst [vmem:[%s357 + $0xd0] sm:$0xff] %v1083
          %1116 = vst [vmem:[%s357 + $0xd8] sm:$0xff] %v1084
          %1117 = vst [vmem:[%s357 + $0xe0] sm:$0xff] %v1085
          %1118 = vst [vmem:[%s357 + $0xe8] sm:$0xff] %v1086
          %1119 = vst [vmem:[%s357 + $0xf0] sm:$0xff] %v1087
          %1120 = vst [vmem:[%s357 + $0xf8] sm:$0xff] %v1088
        $region63: #{decoder_forward.1} parent=50 // pred_fallthru
          _
        %s1121 = smul.u32 32, %s18
        %p1122 = scmp.lt.s32.totalorder %s1121, 63
        %s1123 = scalar_select %p1122, %s1121, 63
        %s1124 = smul.addr %s1123, 8
        %s1125 = scalar_lea.vmem %s3, %s1124
        // Predicated region
        $region64: #{decoder_forward.1} parent=50 // pred_check
          %p1126 = pneg %p119
        $region65: #{decoder_forward.1} parent=50 // pred_check_branch
          %1128 = sbr.rel (%p1126) target = $region67
        $region66: #{decoder_forward.1} parent=50 // pred_region
          %s1129 = smul.u32 32, %s18
        $region67: #{decoder_forward.1} parent=50 // pred_fallthru
          _
      $region51: #{decoder_forward.1} parent=5 // pred_fallthru
        _
      %p1130 = scmp.le.s32.totalorder 2, %s9
      // Predicated region
      $region68: #{decoder_forward.1} parent=5 // pred_check
        %p1131 = pneg %p1130
      $region69: #{decoder_forward.1} parent=5 // pred_check_branch
        %1133 = sbr.rel (%p1131) target = $region71
      $region70: #{decoder_forward.1} parent=5 // pred_region
        %s1134 = ssub.s32 %s9, 2
        // Predicated region
        $region72: #{decoder_forward.1} parent=70 // pred_check
          %p1135 = pneg %p125
        $region73: #{decoder_forward.1} parent=70 // pred_check_branch
          %1137 = sbr.rel (%p1135) target = $region75
        $region74: #{decoder_forward.1} parent=70 // pred_region
          %s1138 = smul.u32 32, %s20
          %p1139 = scmp.lt.s32.totalorder %s1138, 63
          %s1140 = scalar_select %p1139, %s1138, 63
          %s1141 = smul.addr %s1140, 8
          %s1142 = scalar_lea.vmem %s3, %s1141
        $region75: #{decoder_forward.1} parent=70 // pred_fallthru
          _
      $region71: #{decoder_forward.1} parent=5 // pred_fallthru
        _
    $region6: #{decoder_forward.1} parent=1 // loop_footer
      %s13 = sadd.s32 1, %s9
    $region7: #{decoder_forward.1} parent=1 // loop_footer_branch
      %8 = sbr.rel target = $region3
    $region8: #{decoder_forward.1} parent=1 // loop_exit
      _

</llo_original>
